<compile_context>
chip_gen: v5e
topology: v5e:2x2
jax: 0.10.0
libtpu: 0.0.40
codegen_flags: <defaults>
</compile_context>

<pallas_src>
import functools

import jax
import jax.numpy as jnp
from jax.experimental import pallas as pl
from jax.experimental.pallas import tpu as pltpu

# ----------------------------- configuration ------------------------------
BATCH          = 2
FORECAST_LEN   = 28           # FORECAST_LEN // 2 == 14, matching y[:, :14]
HALF_LEN       = FORECAST_LEN // 2
BACKCAST_LEN   = 56
HIDDEN         = 32
THETA_DIM      = 8
NUM_STACKS     = 2
BLOCKS_PER_ST  = 2
NUM_BLOCKS     = NUM_STACKS * BLOCKS_PER_ST     # flattened sequential blocks
NUM_HID_LAYERS = 2

BIAS_WIDTH  = HIDDEN * (1 + NUM_HID_LAYERS) + 2 * THETA_DIM   # 112
BASIS_WIDTH = BACKCAST_LEN + FORECAST_LEN + HALF_LEN          # 98


# ------------------------------- kernel -----------------------------------
def _nbeats_kernel(x_ref, y_ref, scale_ref, weight_ref,
                   w_in_ref, w_hid_ref, w_th_ref, basis_ref, bias_ref,
                   forecast_ref, loss_ref,
                   *, num_blocks, num_hidden_layers,
                   backcast_len, forecast_len, hidden):
    half = forecast_len // 2

    resid = x_ref[...].astype(jnp.float32)                 # (B, BACKCAST_LEN)
    b = resid.shape[0]
    fc_acc = jnp.zeros((b, forecast_len + half), jnp.float32)

    theta_off = hidden * (1 + num_hidden_layers)

    # Fully-unrolled block chain: 4 MXU matmuls per block
    #   (input FC, hidden FCs, fused theta projection, fused block-diag basis)
    for blk in range(num_blocks):
        bias_blk = bias_ref[blk]                            # (1, BIAS_WIDTH) f32

        h = jnp.dot(resid.astype(jnp.bfloat16), w_in_ref[blk],
                    preferred_element_type=jnp.float32)
        h = jnp.maximum(h + bias_blk[:, 0:hidden], 0.0)

        for layer in range(num_hidden_layers):
            h = jnp.dot(h.astype(jnp.bfloat16), w_hid_ref[blk, layer],
                        preferred_element_type=jnp.float32)
            off = hidden * (1 + layer)
            h = jnp.maximum(h + bias_blk[:, off:off + hidden], 0.0)

        # fused [theta_b | theta_f] : (B, 2*THETA_DIM)
        theta = jnp.dot(h.astype(jnp.bfloat16), w_th_ref[blk],
                        preferred_element_type=jnp.float32)
        theta = theta + bias_blk[:, theta_off:]

        # fused [backcast | forecast | forecast1] via block-diagonal basis
        fused = jnp.dot(theta.astype(jnp.bfloat16), basis_ref[blk],
                        preferred_element_type=jnp.float32)  # (B, BASIS_WIDTH)

        resid = resid - fused[:, :backcast_len]
        fc_acc = fc_acc + fused[:, backcast_len:]

    forecast = fc_acc[:, :forecast_len]
    forecast1 = fc_acc[:, forecast_len:]
    forecast_ref[...] = forecast

    # criterion: weighted MAE, mean-reduced (see TODO(synk) at top of file)
    y = y_ref[...].astype(jnp.float32)
    wt = weight_ref[...].astype(jnp.float32)                 # (B, 1)
    inv_sc = pl.reciprocal(scale_ref[...].astype(jnp.float32),
                           approx=True)                      # (B, 1), EUP slot

    err  = wt * jnp.abs(forecast  - y)            * inv_sc
    err1 = wt * jnp.abs(forecast1 - y[:, :half])  * inv_sc
    loss_ref[0, 0] = (jnp.mean(err) + jnp.mean(err1)) * 0.5


# ------------------------------- wrapper -----------------------------------
def nbeats_forward(x, y, scale, weight, params):
    b = x.shape[0]
    kernel = functools.partial(
        _nbeats_kernel,
        num_blocks=NUM_BLOCKS,
        num_hidden_layers=NUM_HID_LAYERS,
        backcast_len=BACKCAST_LEN,
        forecast_len=FORECAST_LEN,
        hidden=HIDDEN,
    )
    n_inputs = 4 + len(params)
    in_specs = [pl.BlockSpec(memory_space=pltpu.MemorySpace.VMEM)
                for _ in range(n_inputs)]
    out_specs = (
        pl.BlockSpec(memory_space=pltpu.MemorySpace.VMEM),   # forecast
        pl.BlockSpec(memory_space=pltpu.MemorySpace.SMEM),   # scalar loss
    )
    forecast, loss = pl.pallas_call(
        kernel,
        in_specs=in_specs,
        out_specs=out_specs,
        out_shape=(
            jax.ShapeDtypeStruct((b, FORECAST_LEN), jnp.float32),
            jax.ShapeDtypeStruct((1, 1), jnp.float32),
        ),
    )(x, y, scale, weight, *params)
    return forecast, loss[0, 0]   # .view() of a 0-d loss tensor -> scalar


# --------------------------- parameter init --------------------------------
def _xavier(key, shape):
    fan_in, fan_out = shape[-2], shape[-1]
    limit = (6.0 / (fan_in + fan_out)) ** 0.5
    return jax.random.uniform(key, shape, jnp.float32, -limit, limit)


def init_params(key):
    ks = jax.random.split(key, 8)
    w_in  = _xavier(ks[0], (NUM_BLOCKS, BACKCAST_LEN, HIDDEN))
    w_hid = _xavier(ks[1], (NUM_BLOCKS, NUM_HID_LAYERS, HIDDEN, HIDDEN))
    w_tb  = _xavier(ks[2], (NUM_BLOCKS, HIDDEN, THETA_DIM))
    w_tf  = _xavier(ks[3], (NUM_BLOCKS, HIDDEN, THETA_DIM))
    g_b   = _xavier(ks[4], (NUM_BLOCKS, THETA_DIM, BACKCAST_LEN))
    g_f   = _xavier(ks[5], (NUM_BLOCKS, THETA_DIM, FORECAST_LEN))
    g_f1  = _xavier(ks[6], (NUM_BLOCKS, THETA_DIM, HALF_LEN))

    # Fused theta projection: [W_tb | W_tf] -> (NB, HIDDEN, 2*THETA_DIM)
    w_th = jnp.concatenate([w_tb, w_tf], axis=-1)

    # Block-diagonal fused basis: theta = [theta_b | theta_f]
    #   rows 0:THETA     -> [ G_b | 0   | 0    ]
    #   rows THETA:2TH   -> [ 0   | G_f | G_f1 ]
    z_top = jnp.zeros((NUM_BLOCKS, THETA_DIM, FORECAST_LEN + HALF_LEN), jnp.float32)
    z_bot = jnp.zeros((NUM_BLOCKS, THETA_DIM, BACKCAST_LEN), jnp.float32)
    basis = jnp.concatenate(
        [jnp.concatenate([g_b, z_top], axis=-1),
         jnp.concatenate([z_bot, g_f, g_f1], axis=-1)],
        axis=1)                                    # (NB, 2*THETA, BASIS_WIDTH)

    # Packed biases (all zero-init, torch zeros_ default):
    #   [b_in(32) | b_hid_0(32) | b_hid_1(32) | b_theta(16)] -> (NB, 1, 112)
    bias = jnp.zeros((NUM_BLOCKS, 1, BIAS_WIDTH), jnp.float32)

    # Matmul weights stored as bf16 (MXU-native, halves DMA bytes);
    # biases / accumulation stay f32.
    return (w_in.astype(jnp.bfloat16),
            w_hid.astype(jnp.bfloat16),
            w_th.astype(jnp.bfloat16),
            basis.astype(jnp.bfloat16),
            bias)


# ---------------------------------- main ------------------------------------
if __name__ == "__main__":
    key = jax.random.PRNGKey(0)
    k_x, k_y, k_s, k_w, k_p = jax.random.split(key, 5)

    x = jax.random.normal(k_x, (BATCH, BACKCAST_LEN), jnp.float32)
    y = jax.random.normal(k_y, (BATCH, FORECAST_LEN), jnp.float32)
    scale = jax.random.uniform(k_s, (BATCH, 1), jnp.float32, 0.5, 1.5)
    weight = jax.random.uniform(k_w, (BATCH, 1), jnp.float32, 0.5, 1.5)

    params = init_params(k_p)

    forecast, loss = nbeats_forward(x, y, scale, weight, params)
    jax.block_until_ready((forecast, loss))

    assert forecast.shape == (BATCH, FORECAST_LEN)
    assert loss.shape == ()
    assert bool(jnp.isfinite(loss))
    print("KERNEL_OK")
</pallas_src>

<mosaic_0001>
module attributes {stable_mosaic.version = 11 : i64} {
  func.func @_nbeats_kernel(%arg0: memref<2x56xf32, #tpu.memory_space<vmem>>, %arg1: memref<2x28xf32, #tpu.memory_space<vmem>>, %arg2: memref<2x1xf32, #tpu.memory_space<vmem>>, %arg3: memref<2x1xf32, #tpu.memory_space<vmem>>, %arg4: memref<4x56x32xbf16, #tpu.memory_space<vmem>>, %arg5: memref<4x2x32x32xbf16, #tpu.memory_space<vmem>>, %arg6: memref<4x32x16xbf16, #tpu.memory_space<vmem>>, %arg7: memref<4x16x98xbf16, #tpu.memory_space<vmem>>, %arg8: memref<4x1x112xf32, #tpu.memory_space<vmem>>, %arg9: memref<2x28xf32, #tpu.memory_space<vmem>>, %arg10: memref<1x1xf32, #tpu.memory_space<smem>>) attributes {dimension_semantics = [], scalar_prefetch = 0 : i64, scratch_operands = 0 : i64, tpu.core_type = #tpu.core_type<tc>} {
    %c0 = arith.constant 0 : index
    %c0_0 = arith.constant 0 : index
    %0 = vector.load %arg0[%c0, %c0_0] : memref<2x56xf32, #tpu.memory_space<vmem>>, vector<2x56xf32>
    %cst = arith.constant 0.000000e+00 : f32
    %1 = vector.broadcast %cst : f32 to vector<2x42xf32>
    %c0_1 = arith.constant 0 : index
    %c0_2 = arith.constant 0 : index
    %c0_3 = arith.constant 0 : index
    %2 = vector.load %arg8[%c0_1, %c0_2, %c0_3] : memref<4x1x112xf32, #tpu.memory_space<vmem>>, vector<1x1x112xf32>
    %3 = vector.shape_cast %2 : vector<1x1x112xf32> to vector<1x112xf32>
    %4 = arith.truncf %0 : vector<2x56xf32> to vector<2x56xbf16>
    %c0_4 = arith.constant 0 : index
    %c0_5 = arith.constant 0 : index
    %c0_6 = arith.constant 0 : index
    %5 = vector.load %arg4[%c0_4, %c0_5, %c0_6] : memref<4x56x32xbf16, #tpu.memory_space<vmem>>, vector<1x56x32xbf16>
    %6 = vector.shape_cast %5 : vector<1x56x32xbf16> to vector<56x32xbf16>
    %cst_7 = arith.constant dense<0.000000e+00> : vector<2x32xf32>
    %7 = tpu.matmul %4, %6, %cst_7 {dimension_numbers = #tpu.dot_dimension_numbers<[1], [0], [0], [1], [0, 0, 1, 1], [], []>} : vector<2x56xbf16>, vector<56x32xbf16>, vector<2x32xf32> -> vector<2x32xf32>
    %8 = vector.extract_strided_slice %3 {offsets = [0, 0], sizes = [1, 32], strides = [1, 1]} : vector<1x112xf32> to vector<1x32xf32>
    %9 = vector.broadcast %8 : vector<1x32xf32> to vector<2x32xf32>
    %10 = arith.addf %7, %9 : vector<2x32xf32>
    %cst_8 = arith.constant 0.000000e+00 : f32
    %11 = vector.broadcast %cst_8 : f32 to vector<2x32xf32>
    %12 = arith.maximumf %10, %11 : vector<2x32xf32>
    %13 = arith.truncf %12 : vector<2x32xf32> to vector<2x32xbf16>
    %c0_9 = arith.constant 0 : index
    %c0_10 = arith.constant 0 : index
    %c0_11 = arith.constant 0 : index
    %c0_12 = arith.constant 0 : index
    %14 = vector.load %arg5[%c0_9, %c0_10, %c0_11, %c0_12] : memref<4x2x32x32xbf16, #tpu.memory_space<vmem>>, vector<1x1x32x32xbf16>
    %15 = vector.shape_cast %14 : vector<1x1x32x32xbf16> to vector<32x32xbf16>
    %cst_13 = arith.constant dense<0.000000e+00> : vector<2x32xf32>
    %16 = tpu.matmul %13, %15, %cst_13 {dimension_numbers = #tpu.dot_dimension_numbers<[1], [0], [0], [1], [0, 0, 1, 1], [], []>} : vector<2x32xbf16>, vector<32x32xbf16>, vector<2x32xf32> -> vector<2x32xf32>
    %17 = vector.extract_strided_slice %3 {offsets = [0, 32], sizes = [1, 32], strides = [1, 1]} : vector<1x112xf32> to vector<1x32xf32>
    %18 = vector.broadcast %17 : vector<1x32xf32> to vector<2x32xf32>
    %19 = arith.addf %16, %18 : vector<2x32xf32>
    %cst_14 = arith.constant 0.000000e+00 : f32
    %20 = vector.broadcast %cst_14 : f32 to vector<2x32xf32>
    %21 = arith.maximumf %19, %20 : vector<2x32xf32>
    %22 = arith.truncf %21 : vector<2x32xf32> to vector<2x32xbf16>
    %c0_15 = arith.constant 0 : index
    %c1 = arith.constant 1 : index
    %c0_16 = arith.constant 0 : index
    %c0_17 = arith.constant 0 : index
    %23 = vector.load %arg5[%c0_15, %c1, %c0_16, %c0_17] : memref<4x2x32x32xbf16, #tpu.memory_space<vmem>>, vector<1x1x32x32xbf16>
    %24 = vector.shape_cast %23 : vector<1x1x32x32xbf16> to vector<32x32xbf16>
    %cst_18 = arith.constant dense<0.000000e+00> : vector<2x32xf32>
    %25 = tpu.matmul %22, %24, %cst_18 {dimension_numbers = #tpu.dot_dimension_numbers<[1], [0], [0], [1], [0, 0, 1, 1], [], []>} : vector<2x32xbf16>, vector<32x32xbf16>, vector<2x32xf32> -> vector<2x32xf32>
    %26 = vector.extract_strided_slice %3 {offsets = [0, 64], sizes = [1, 32], strides = [1, 1]} : vector<1x112xf32> to vector<1x32xf32>
    %27 = vector.broadcast %26 : vector<1x32xf32> to vector<2x32xf32>
    %28 = arith.addf %25, %27 : vector<2x32xf32>
    %cst_19 = arith.constant 0.000000e+00 : f32
    %29 = vector.broadcast %cst_19 : f32 to vector<2x32xf32>
    %30 = arith.maximumf %28, %29 : vector<2x32xf32>
    %31 = arith.truncf %30 : vector<2x32xf32> to vector<2x32xbf16>
    %c0_20 = arith.constant 0 : index
    %c0_21 = arith.constant 0 : index
    %c0_22 = arith.constant 0 : index
    %32 = vector.load %arg6[%c0_20, %c0_21, %c0_22] : memref<4x32x16xbf16, #tpu.memory_space<vmem>>, vector<1x32x16xbf16>
    %33 = vector.shape_cast %32 : vector<1x32x16xbf16> to vector<32x16xbf16>
    %cst_23 = arith.constant dense<0.000000e+00> : vector<2x16xf32>
    %34 = tpu.matmul %31, %33, %cst_23 {dimension_numbers = #tpu.dot_dimension_numbers<[1], [0], [0], [1], [0, 0, 1, 1], [], []>} : vector<2x32xbf16>, vector<32x16xbf16>, vector<2x16xf32> -> vector<2x16xf32>
    %35 = vector.extract_strided_slice %3 {offsets = [0, 96], sizes = [1, 16], strides = [1, 1]} : vector<1x112xf32> to vector<1x16xf32>
    %36 = vector.broadcast %35 : vector<1x16xf32> to vector<2x16xf32>
    %37 = arith.addf %34, %36 : vector<2x16xf32>
    %38 = arith.truncf %37 : vector<2x16xf32> to vector<2x16xbf16>
    %c0_24 = arith.constant 0 : index
    %c0_25 = arith.constant 0 : index
    %c0_26 = arith.constant 0 : index
    %39 = vector.load %arg7[%c0_24, %c0_25, %c0_26] : memref<4x16x98xbf16, #tpu.memory_space<vmem>>, vector<1x16x98xbf16>
    %40 = vector.shape_cast %39 : vector<1x16x98xbf16> to vector<16x98xbf16>
    %cst_27 = arith.constant dense<0.000000e+00> : vector<2x98xf32>
    %41 = tpu.matmul %38, %40, %cst_27 {dimension_numbers = #tpu.dot_dimension_numbers<[1], [0], [0], [1], [0, 0, 1, 1], [], []>} : vector<2x16xbf16>, vector<16x98xbf16>, vector<2x98xf32> -> vector<2x98xf32>
    %42 = vector.extract_strided_slice %41 {offsets = [0, 0], sizes = [2, 56], strides = [1, 1]} : vector<2x98xf32> to vector<2x56xf32>
    %43 = arith.subf %0, %42 : vector<2x56xf32>
    %44 = vector.extract_strided_slice %41 {offsets = [0, 56], sizes = [2, 42], strides = [1, 1]} : vector<2x98xf32> to vector<2x42xf32>
    %45 = arith.addf %1, %44 : vector<2x42xf32>
    %c1_28 = arith.constant 1 : index
    %c0_29 = arith.constant 0 : index
    %c0_30 = arith.constant 0 : index
    %46 = vector.load %arg8[%c1_28, %c0_29, %c0_30] : memref<4x1x112xf32, #tpu.memory_space<vmem>>, vector<1x1x112xf32>
    %47 = vector.shape_cast %46 : vector<1x1x112xf32> to vector<1x112xf32>
    %48 = arith.truncf %43 : vector<2x56xf32> to vector<2x56xbf16>
    %c1_31 = arith.constant 1 : index
    %c0_32 = arith.constant 0 : index
    %c0_33 = arith.constant 0 : index
    %49 = vector.load %arg4[%c1_31, %c0_32, %c0_33] : memref<4x56x32xbf16, #tpu.memory_space<vmem>>, vector<1x56x32xbf16>
    %50 = vector.shape_cast %49 : vector<1x56x32xbf16> to vector<56x32xbf16>
    %cst_34 = arith.constant dense<0.000000e+00> : vector<2x32xf32>
    %51 = tpu.matmul %48, %50, %cst_34 {dimension_numbers = #tpu.dot_dimension_numbers<[1], [0], [0], [1], [0, 0, 1, 1], [], []>} : vector<2x56xbf16>, vector<56x32xbf16>, vector<2x32xf32> -> vector<2x32xf32>
    %52 = vector.extract_strided_slice %47 {offsets = [0, 0], sizes = [1, 32], strides = [1, 1]} : vector<1x112xf32> to vector<1x32xf32>
    %53 = vector.broadcast %52 : vector<1x32xf32> to vector<2x32xf32>
    %54 = arith.addf %51, %53 : vector<2x32xf32>
    %cst_35 = arith.constant 0.000000e+00 : f32
    %55 = vector.broadcast %cst_35 : f32 to vector<2x32xf32>
    %56 = arith.maximumf %54, %55 : vector<2x32xf32>
    %57 = arith.truncf %56 : vector<2x32xf32> to vector<2x32xbf16>
    %c1_36 = arith.constant 1 : index
    %c0_37 = arith.constant 0 : index
    %c0_38 = arith.constant 0 : index
    %c0_39 = arith.constant 0 : index
    %58 = vector.load %arg5[%c1_36, %c0_37, %c0_38, %c0_39] : memref<4x2x32x32xbf16, #tpu.memory_space<vmem>>, vector<1x1x32x32xbf16>
    %59 = vector.shape_cast %58 : vector<1x1x32x32xbf16> to vector<32x32xbf16>
    %cst_40 = arith.constant dense<0.000000e+00> : vector<2x32xf32>
    %60 = tpu.matmul %57, %59, %cst_40 {dimension_numbers = #tpu.dot_dimension_numbers<[1], [0], [0], [1], [0, 0, 1, 1], [], []>} : vector<2x32xbf16>, vector<32x32xbf16>, vector<2x32xf32> -> vector<2x32xf32>
    %61 = vector.extract_strided_slice %47 {offsets = [0, 32], sizes = [1, 32], strides = [1, 1]} : vector<1x112xf32> to vector<1x32xf32>
    %62 = vector.broadcast %61 : vector<1x32xf32> to vector<2x32xf32>
    %63 = arith.addf %60, %62 : vector<2x32xf32>
    %cst_41 = arith.constant 0.000000e+00 : f32
    %64 = vector.broadcast %cst_41 : f32 to vector<2x32xf32>
    %65 = arith.maximumf %63, %64 : vector<2x32xf32>
    %66 = arith.truncf %65 : vector<2x32xf32> to vector<2x32xbf16>
    %c1_42 = arith.constant 1 : index
    %c1_43 = arith.constant 1 : index
    %c0_44 = arith.constant 0 : index
    %c0_45 = arith.constant 0 : index
    %67 = vector.load %arg5[%c1_42, %c1_43, %c0_44, %c0_45] : memref<4x2x32x32xbf16, #tpu.memory_space<vmem>>, vector<1x1x32x32xbf16>
    %68 = vector.shape_cast %67 : vector<1x1x32x32xbf16> to vector<32x32xbf16>
    %cst_46 = arith.constant dense<0.000000e+00> : vector<2x32xf32>
    %69 = tpu.matmul %66, %68, %cst_46 {dimension_numbers = #tpu.dot_dimension_numbers<[1], [0], [0], [1], [0, 0, 1, 1], [], []>} : vector<2x32xbf16>, vector<32x32xbf16>, vector<2x32xf32> -> vector<2x32xf32>
    %70 = vector.extract_strided_slice %47 {offsets = [0, 64], sizes = [1, 32], strides = [1, 1]} : vector<1x112xf32> to vector<1x32xf32>
    %71 = vector.broadcast %70 : vector<1x32xf32> to vector<2x32xf32>
    %72 = arith.addf %69, %71 : vector<2x32xf32>
    %cst_47 = arith.constant 0.000000e+00 : f32
    %73 = vector.broadcast %cst_47 : f32 to vector<2x32xf32>
    %74 = arith.maximumf %72, %73 : vector<2x32xf32>
    %75 = arith.truncf %74 : vector<2x32xf32> to vector<2x32xbf16>
    %c1_48 = arith.constant 1 : index
    %c0_49 = arith.constant 0 : index
    %c0_50 = arith.constant 0 : index
    %76 = vector.load %arg6[%c1_48, %c0_49, %c0_50] : memref<4x32x16xbf16, #tpu.memory_space<vmem>>, vector<1x32x16xbf16>
    %77 = vector.shape_cast %76 : vector<1x32x16xbf16> to vector<32x16xbf16>
    %cst_51 = arith.constant dense<0.000000e+00> : vector<2x16xf32>
    %78 = tpu.matmul %75, %77, %cst_51 {dimension_numbers = #tpu.dot_dimension_numbers<[1], [0], [0], [1], [0, 0, 1, 1], [], []>} : vector<2x32xbf16>, vector<32x16xbf16>, vector<2x16xf32> -> vector<2x16xf32>
    %79 = vector.extract_strided_slice %47 {offsets = [0, 96], sizes = [1, 16], strides = [1, 1]} : vector<1x112xf32> to vector<1x16xf32>
    %80 = vector.broadcast %79 : vector<1x16xf32> to vector<2x16xf32>
    %81 = arith.addf %78, %80 : vector<2x16xf32>
    %82 = arith.truncf %81 : vector<2x16xf32> to vector<2x16xbf16>
    %c1_52 = arith.constant 1 : index
    %c0_53 = arith.constant 0 : index
    %c0_54 = arith.constant 0 : index
    %83 = vector.load %arg7[%c1_52, %c0_53, %c0_54] : memref<4x16x98xbf16, #tpu.memory_space<vmem>>, vector<1x16x98xbf16>
    %84 = vector.shape_cast %83 : vector<1x16x98xbf16> to vector<16x98xbf16>
    %cst_55 = arith.constant dense<0.000000e+00> : vector<2x98xf32>
    %85 = tpu.matmul %82, %84, %cst_55 {dimension_numbers = #tpu.dot_dimension_numbers<[1], [0], [0], [1], [0, 0, 1, 1], [], []>} : vector<2x16xbf16>, vector<16x98xbf16>, vector<2x98xf32> -> vector<2x98xf32>
    %86 = vector.extract_strided_slice %85 {offsets = [0, 0], sizes = [2, 56], strides = [1, 1]} : vector<2x98xf32> to vector<2x56xf32>
    %87 = arith.subf %43, %86 : vector<2x56xf32>
    %88 = vector.extract_strided_slice %85 {offsets = [0, 56], sizes = [2, 42], strides = [1, 1]} : vector<2x98xf32> to vector<2x42xf32>
    %89 = arith.addf %45, %88 : vector<2x42xf32>
    %c2 = arith.constant 2 : index
    %c0_56 = arith.constant 0 : index
    %c0_57 = arith.constant 0 : index
    %90 = vector.load %arg8[%c2, %c0_56, %c0_57] : memref<4x1x112xf32, #tpu.memory_space<vmem>>, vector<1x1x112xf32>
    %91 = vector.shape_cast %90 : vector<1x1x112xf32> to vector<1x112xf32>
    %92 = arith.truncf %87 : vector<2x56xf32> to vector<2x56xbf16>
    %c2_58 = arith.constant 2 : index
    %c0_59 = arith.constant 0 : index
    %c0_60 = arith.constant 0 : index
    %93 = vector.load %arg4[%c2_58, %c0_59, %c0_60] : memref<4x56x32xbf16, #tpu.memory_space<vmem>>, vector<1x56x32xbf16>
    %94 = vector.shape_cast %93 : vector<1x56x32xbf16> to vector<56x32xbf16>
    %cst_61 = arith.constant dense<0.000000e+00> : vector<2x32xf32>
    %95 = tpu.matmul %92, %94, %cst_61 {dimension_numbers = #tpu.dot_dimension_numbers<[1], [0], [0], [1], [0, 0, 1, 1], [], []>} : vector<2x56xbf16>, vector<56x32xbf16>, vector<2x32xf32> -> vector<2x32xf32>
    %96 = vector.extract_strided_slice %91 {offsets = [0, 0], sizes = [1, 32], strides = [1, 1]} : vector<1x112xf32> to vector<1x32xf32>
    %97 = vector.broadcast %96 : vector<1x32xf32> to vector<2x32xf32>
    %98 = arith.addf %95, %97 : vector<2x32xf32>
    %cst_62 = arith.constant 0.000000e+00 : f32
    %99 = vector.broadcast %cst_62 : f32 to vector<2x32xf32>
    %100 = arith.maximumf %98, %99 : vector<2x32xf32>
    %101 = arith.truncf %100 : vector<2x32xf32> to vector<2x32xbf16>
    %c2_63 = arith.constant 2 : index
    %c0_64 = arith.constant 0 : index
    %c0_65 = arith.constant 0 : index
    %c0_66 = arith.constant 0 : index
    %102 = vector.load %arg5[%c2_63, %c0_64, %c0_65, %c0_66] : memref<4x2x32x32xbf16, #tpu.memory_space<vmem>>, vector<1x1x32x32xbf16>
    %103 = vector.shape_cast %102 : vector<1x1x32x32xbf16> to vector<32x32xbf16>
    %cst_67 = arith.constant dense<0.000000e+00> : vector<2x32xf32>
    %104 = tpu.matmul %101, %103, %cst_67 {dimension_numbers = #tpu.dot_dimension_numbers<[1], [0], [0], [1], [0, 0, 1, 1], [], []>} : vector<2x32xbf16>, vector<32x32xbf16>, vector<2x32xf32> -> vector<2x32xf32>
    %105 = vector.extract_strided_slice %91 {offsets = [0, 32], sizes = [1, 32], strides = [1, 1]} : vector<1x112xf32> to vector<1x32xf32>
    %106 = vector.broadcast %105 : vector<1x32xf32> to vector<2x32xf32>
    %107 = arith.addf %104, %106 : vector<2x32xf32>
    %cst_68 = arith.constant 0.000000e+00 : f32
    %108 = vector.broadcast %cst_68 : f32 to vector<2x32xf32>
    %109 = arith.maximumf %107, %108 : vector<2x32xf32>
    %110 = arith.truncf %109 : vector<2x32xf32> to vector<2x32xbf16>
    %c2_69 = arith.constant 2 : index
    %c1_70 = arith.constant 1 : index
    %c0_71 = arith.constant 0 : index
    %c0_72 = arith.constant 0 : index
    %111 = vector.load %arg5[%c2_69, %c1_70, %c0_71, %c0_72] : memref<4x2x32x32xbf16, #tpu.memory_space<vmem>>, vector<1x1x32x32xbf16>
    %112 = vector.shape_cast %111 : vector<1x1x32x32xbf16> to vector<32x32xbf16>
    %cst_73 = arith.constant dense<0.000000e+00> : vector<2x32xf32>
    %113 = tpu.matmul %110, %112, %cst_73 {dimension_numbers = #tpu.dot_dimension_numbers<[1], [0], [0], [1], [0, 0, 1, 1], [], []>} : vector<2x32xbf16>, vector<32x32xbf16>, vector<2x32xf32> -> vector<2x32xf32>
    %114 = vector.extract_strided_slice %91 {offsets = [0, 64], sizes = [1, 32], strides = [1, 1]} : vector<1x112xf32> to vector<1x32xf32>
    %115 = vector.broadcast %114 : vector<1x32xf32> to vector<2x32xf32>
    %116 = arith.addf %113, %115 : vector<2x32xf32>
    %cst_74 = arith.constant 0.000000e+00 : f32
    %117 = vector.broadcast %cst_74 : f32 to vector<2x32xf32>
    %118 = arith.maximumf %116, %117 : vector<2x32xf32>
    %119 = arith.truncf %118 : vector<2x32xf32> to vector<2x32xbf16>
    %c2_75 = arith.constant 2 : index
    %c0_76 = arith.constant 0 : index
    %c0_77 = arith.constant 0 : index
    %120 = vector.load %arg6[%c2_75, %c0_76, %c0_77] : memref<4x32x16xbf16, #tpu.memory_space<vmem>>, vector<1x32x16xbf16>
    %121 = vector.shape_cast %120 : vector<1x32x16xbf16> to vector<32x16xbf16>
    %cst_78 = arith.constant dense<0.000000e+00> : vector<2x16xf32>
    %122 = tpu.matmul %119, %121, %cst_78 {dimension_numbers = #tpu.dot_dimension_numbers<[1], [0], [0], [1], [0, 0, 1, 1], [], []>} : vector<2x32xbf16>, vector<32x16xbf16>, vector<2x16xf32> -> vector<2x16xf32>
    %123 = vector.extract_strided_slice %91 {offsets = [0, 96], sizes = [1, 16], strides = [1, 1]} : vector<1x112xf32> to vector<1x16xf32>
    %124 = vector.broadcast %123 : vector<1x16xf32> to vector<2x16xf32>
    %125 = arith.addf %122, %124 : vector<2x16xf32>
    %126 = arith.truncf %125 : vector<2x16xf32> to vector<2x16xbf16>
    %c2_79 = arith.constant 2 : index
    %c0_80 = arith.constant 0 : index
    %c0_81 = arith.constant 0 : index
    %127 = vector.load %arg7[%c2_79, %c0_80, %c0_81] : memref<4x16x98xbf16, #tpu.memory_space<vmem>>, vector<1x16x98xbf16>
    %128 = vector.shape_cast %127 : vector<1x16x98xbf16> to vector<16x98xbf16>
    %cst_82 = arith.constant dense<0.000000e+00> : vector<2x98xf32>
    %129 = tpu.matmul %126, %128, %cst_82 {dimension_numbers = #tpu.dot_dimension_numbers<[1], [0], [0], [1], [0, 0, 1, 1], [], []>} : vector<2x16xbf16>, vector<16x98xbf16>, vector<2x98xf32> -> vector<2x98xf32>
    %130 = vector.extract_strided_slice %129 {offsets = [0, 0], sizes = [2, 56], strides = [1, 1]} : vector<2x98xf32> to vector<2x56xf32>
    %131 = arith.subf %87, %130 : vector<2x56xf32>
    %132 = vector.extract_strided_slice %129 {offsets = [0, 56], sizes = [2, 42], strides = [1, 1]} : vector<2x98xf32> to vector<2x42xf32>
    %133 = arith.addf %89, %132 : vector<2x42xf32>
    %c3 = arith.constant 3 : index
    %c0_83 = arith.constant 0 : index
    %c0_84 = arith.constant 0 : index
    %134 = vector.load %arg8[%c3, %c0_83, %c0_84] : memref<4x1x112xf32, #tpu.memory_space<vmem>>, vector<1x1x112xf32>
    %135 = vector.shape_cast %134 : vector<1x1x112xf32> to vector<1x112xf32>
    %136 = arith.truncf %131 : vector<2x56xf32> to vector<2x56xbf16>
    %c3_85 = arith.constant 3 : index
    %c0_86 = arith.constant 0 : index
    %c0_87 = arith.constant 0 : index
    %137 = vector.load %arg4[%c3_85, %c0_86, %c0_87] : memref<4x56x32xbf16, #tpu.memory_space<vmem>>, vector<1x56x32xbf16>
    %138 = vector.shape_cast %137 : vector<1x56x32xbf16> to vector<56x32xbf16>
    %cst_88 = arith.constant dense<0.000000e+00> : vector<2x32xf32>
    %139 = tpu.matmul %136, %138, %cst_88 {dimension_numbers = #tpu.dot_dimension_numbers<[1], [0], [0], [1], [0, 0, 1, 1], [], []>} : vector<2x56xbf16>, vector<56x32xbf16>, vector<2x32xf32> -> vector<2x32xf32>
    %140 = vector.extract_strided_slice %135 {offsets = [0, 0], sizes = [1, 32], strides = [1, 1]} : vector<1x112xf32> to vector<1x32xf32>
    %141 = vector.broadcast %140 : vector<1x32xf32> to vector<2x32xf32>
    %142 = arith.addf %139, %141 : vector<2x32xf32>
    %cst_89 = arith.constant 0.000000e+00 : f32
    %143 = vector.broadcast %cst_89 : f32 to vector<2x32xf32>
    %144 = arith.maximumf %142, %143 : vector<2x32xf32>
    %145 = arith.truncf %144 : vector<2x32xf32> to vector<2x32xbf16>
    %c3_90 = arith.constant 3 : index
    %c0_91 = arith.constant 0 : index
    %c0_92 = arith.constant 0 : index
    %c0_93 = arith.constant 0 : index
    %146 = vector.load %arg5[%c3_90, %c0_91, %c0_92, %c0_93] : memref<4x2x32x32xbf16, #tpu.memory_space<vmem>>, vector<1x1x32x32xbf16>
    %147 = vector.shape_cast %146 : vector<1x1x32x32xbf16> to vector<32x32xbf16>
    %cst_94 = arith.constant dense<0.000000e+00> : vector<2x32xf32>
    %148 = tpu.matmul %145, %147, %cst_94 {dimension_numbers = #tpu.dot_dimension_numbers<[1], [0], [0], [1], [0, 0, 1, 1], [], []>} : vector<2x32xbf16>, vector<32x32xbf16>, vector<2x32xf32> -> vector<2x32xf32>
    %149 = vector.extract_strided_slice %135 {offsets = [0, 32], sizes = [1, 32], strides = [1, 1]} : vector<1x112xf32> to vector<1x32xf32>
    %150 = vector.broadcast %149 : vector<1x32xf32> to vector<2x32xf32>
    %151 = arith.addf %148, %150 : vector<2x32xf32>
    %cst_95 = arith.constant 0.000000e+00 : f32
    %152 = vector.broadcast %cst_95 : f32 to vector<2x32xf32>
    %153 = arith.maximumf %151, %152 : vector<2x32xf32>
    %154 = arith.truncf %153 : vector<2x32xf32> to vector<2x32xbf16>
    %c3_96 = arith.constant 3 : index
    %c1_97 = arith.constant 1 : index
    %c0_98 = arith.constant 0 : index
    %c0_99 = arith.constant 0 : index
    %155 = vector.load %arg5[%c3_96, %c1_97, %c0_98, %c0_99] : memref<4x2x32x32xbf16, #tpu.memory_space<vmem>>, vector<1x1x32x32xbf16>
    %156 = vector.shape_cast %155 : vector<1x1x32x32xbf16> to vector<32x32xbf16>
    %cst_100 = arith.constant dense<0.000000e+00> : vector<2x32xf32>
    %157 = tpu.matmul %154, %156, %cst_100 {dimension_numbers = #tpu.dot_dimension_numbers<[1], [0], [0], [1], [0, 0, 1, 1], [], []>} : vector<2x32xbf16>, vector<32x32xbf16>, vector<2x32xf32> -> vector<2x32xf32>
    %158 = vector.extract_strided_slice %135 {offsets = [0, 64], sizes = [1, 32], strides = [1, 1]} : vector<1x112xf32> to vector<1x32xf32>
    %159 = vector.broadcast %158 : vector<1x32xf32> to vector<2x32xf32>
    %160 = arith.addf %157, %159 : vector<2x32xf32>
    %cst_101 = arith.constant 0.000000e+00 : f32
    %161 = vector.broadcast %cst_101 : f32 to vector<2x32xf32>
    %162 = arith.maximumf %160, %161 : vector<2x32xf32>
    %163 = arith.truncf %162 : vector<2x32xf32> to vector<2x32xbf16>
    %c3_102 = arith.constant 3 : index
    %c0_103 = arith.constant 0 : index
    %c0_104 = arith.constant 0 : index
    %164 = vector.load %arg6[%c3_102, %c0_103, %c0_104] : memref<4x32x16xbf16, #tpu.memory_space<vmem>>, vector<1x32x16xbf16>
    %165 = vector.shape_cast %164 : vector<1x32x16xbf16> to vector<32x16xbf16>
    %cst_105 = arith.constant dense<0.000000e+00> : vector<2x16xf32>
    %166 = tpu.matmul %163, %165, %cst_105 {dimension_numbers = #tpu.dot_dimension_numbers<[1], [0], [0], [1], [0, 0, 1, 1], [], []>} : vector<2x32xbf16>, vector<32x16xbf16>, vector<2x16xf32> -> vector<2x16xf32>
    %167 = vector.extract_strided_slice %135 {offsets = [0, 96], sizes = [1, 16], strides = [1, 1]} : vector<1x112xf32> to vector<1x16xf32>
    %168 = vector.broadcast %167 : vector<1x16xf32> to vector<2x16xf32>
    %169 = arith.addf %166, %168 : vector<2x16xf32>
    %170 = arith.truncf %169 : vector<2x16xf32> to vector<2x16xbf16>
    %c3_106 = arith.constant 3 : index
    %c0_107 = arith.constant 0 : index
    %c0_108 = arith.constant 0 : index
    %171 = vector.load %arg7[%c3_106, %c0_107, %c0_108] : memref<4x16x98xbf16, #tpu.memory_space<vmem>>, vector<1x16x98xbf16>
    %172 = vector.shape_cast %171 : vector<1x16x98xbf16> to vector<16x98xbf16>
    %cst_109 = arith.constant dense<0.000000e+00> : vector<2x98xf32>
    %173 = tpu.matmul %170, %172, %cst_109 {dimension_numbers = #tpu.dot_dimension_numbers<[1], [0], [0], [1], [0, 0, 1, 1], [], []>} : vector<2x16xbf16>, vector<16x98xbf16>, vector<2x98xf32> -> vector<2x98xf32>
    %174 = vector.extract_strided_slice %173 {offsets = [0, 56], sizes = [2, 42], strides = [1, 1]} : vector<2x98xf32> to vector<2x42xf32>
    %175 = arith.addf %133, %174 : vector<2x42xf32>
    %176 = vector.extract_strided_slice %175 {offsets = [0, 0], sizes = [2, 28], strides = [1, 1]} : vector<2x42xf32> to vector<2x28xf32>
    %177 = vector.extract_strided_slice %175 {offsets = [0, 28], sizes = [2, 14], strides = [1, 1]} : vector<2x42xf32> to vector<2x14xf32>
    %c0_110 = arith.constant 0 : index
    %c0_111 = arith.constant 0 : index
    %178 = vector.load %arg9[%c0_110, %c0_111] : memref<2x28xf32, #tpu.memory_space<vmem>>, vector<2x28xf32>
    tpu.vector_store %arg9[%c0_110, %c0_111], %176 {strides = array<i32>} : memref<2x28xf32, #tpu.memory_space<vmem>>, vector<2x28xf32>,
    %c0_112 = arith.constant 0 : index
    %c0_113 = arith.constant 0 : index
    %179 = vector.load %arg1[%c0_112, %c0_113] : memref<2x28xf32, #tpu.memory_space<vmem>>, vector<2x28xf32>
    %c0_114 = arith.constant 0 : index
    %c0_115 = arith.constant 0 : index
    %180 = vector.load %arg3[%c0_114, %c0_115] : memref<2x1xf32, #tpu.memory_space<vmem>>, vector<2x1xf32>
    %c0_116 = arith.constant 0 : index
    %c0_117 = arith.constant 0 : index
    %181 = vector.load %arg2[%c0_116, %c0_117] : memref<2x1xf32, #tpu.memory_space<vmem>>, vector<2x1xf32>
    %182 = tpu.reciprocal %181 {approx = true} : vector<2x1xf32> -> vector<2x1xf32>
    %183 = arith.subf %176, %179 : vector<2x28xf32>
    %184 = math.absf %183 : vector<2x28xf32>
    %185 = vector.broadcast %180 : vector<2x1xf32> to vector<2x28xf32>
    %186 = arith.mulf %185, %184 : vector<2x28xf32>
    %187 = vector.broadcast %182 : vector<2x1xf32> to vector<2x28xf32>
    %188 = arith.mulf %186, %187 : vector<2x28xf32>
    %189 = vector.extract_strided_slice %179 {offsets = [0, 0], sizes = [2, 14], strides = [1, 1]} : vector<2x28xf32> to vector<2x14xf32>
    %190 = arith.subf %177, %189 : vector<2x14xf32>
    %191 = math.absf %190 : vector<2x14xf32>
    %192 = vector.broadcast %180 : vector<2x1xf32> to vector<2x14xf32>
    %193 = arith.mulf %192, %191 : vector<2x14xf32>
    %194 = vector.broadcast %182 : vector<2x1xf32> to vector<2x14xf32>
    %195 = arith.mulf %193, %194 : vector<2x14xf32>
    %196 = vector.shape_cast %188 : vector<2x28xf32> to vector<1x2x28xf32>
    %cst_118 = arith.constant dense<0.000000e+00> : vector<1xf32>
    %197 = vector.multi_reduction <add>, %196, %cst_118 [1, 2] : vector<1x2x28xf32> to vector<1xf32>
    %198 = vector.shape_cast %197 : vector<1xf32> to vector<1x1x1xf32>
    %199 = vector.extract %198[0, 0, 0] : f32 from vector<1x1x1xf32>
    %cst_119 = arith.constant 5.600000e+01 : f32
    %200 = arith.divf %199, %cst_119 : f32
    %201 = vector.shape_cast %195 : vector<2x14xf32> to vector<1x2x14xf32>
    %cst_120 = arith.constant dense<0.000000e+00> : vector<1xf32>
    %202 = vector.multi_reduction <add>, %201, %cst_120 [1, 2] : vector<1x2x14xf32> to vector<1xf32>
    %203 = vector.shape_cast %202 : vector<1xf32> to vector<1x1x1xf32>
    %204 = vector.extract %203[0, 0, 0] : f32 from vector<1x1x1xf32>
    %cst_121 = arith.constant 2.800000e+01 : f32
    %205 = arith.divf %204, %cst_121 : f32
    %206 = arith.addf %200, %205 : f32
    %cst_122 = arith.constant 5.000000e-01 : f32
    %207 = arith.mulf %206, %cst_122 : f32
    %c0_123 = arith.constant 0 : index
    %c0_124 = arith.constant 0 : index
    %208 = memref.load %arg10[%c0_123, %c0_124] : memref<1x1xf32, #tpu.memory_space<smem>>
    memref.store %207, %arg10[%c0_123, %c0_124] : memref<1x1xf32, #tpu.memory_space<smem>>
    return
  }
}

</mosaic_0001>

<llo_original>
// kernel: tpu_custom_call.1
$region0: #{tpu_custom_call.1}
  #allocation0 [shape = 'u32[]', space=smem, size = 0x4, offset = 0x4, fixed_abs, tag = 'smem constant byte address 0x4 - core index']
  #allocation1 [shape = 'u32[72,128]{1,0:T(1,128)}', space=vmem, size = 0x9000, scoped, tag = 'internal scratch']
  %s0 = inlined_call_operand.vmem [shape: f32[2,56], index: 0, kind: input, shape index: {}]
  %s1 = inlined_call_operand.vmem [shape: f32[2,28], index: 1, kind: input, shape index: {}]
  %s2 = inlined_call_operand.vmem [shape: f32[2,1], index: 2, kind: input, shape index: {}]
  %s3 = inlined_call_operand.vmem [shape: f32[2,1], index: 3, kind: input, shape index: {}]
  %s4 = inlined_call_operand.vmem [shape: bf16[4,56,32], index: 4, kind: input, shape index: {}]
  %s5 = inlined_call_operand.vmem [shape: bf16[4,2,32,32], index: 5, kind: input, shape index: {}]
  %s6 = inlined_call_operand.vmem [shape: bf16[4,32,16], index: 6, kind: input, shape index: {}]
  %s7 = inlined_call_operand.vmem [shape: bf16[4,16,98], index: 7, kind: input, shape index: {}]
  %s8 = inlined_call_operand.vmem [shape: f32[4,1,112], index: 8, kind: input, shape index: {}]
  %s9 = inlined_call_operand.hbm [shape: f32[2,28], index: 9, kind: output, shape index: {0}]
  %s10 = inlined_call_operand.hbm [shape: f32[1,1], index: 10, kind: output, shape index: {1}]
  %11 = xla_tuple %s9, %s10
  %s12 = sld [smem:[#allocation0]]
  $region54: #{tpu_custom_call.1} parent=0
    _
  %s14 = ssub.s32 1, %s12
  %s15 = scalar_select 0, %s14, %s12
  $region1: #{tpu_custom_call.1} parent=0
    #allocation2 [shape = 'u8[1024]{0}', space=vmem, size = 0x400, scoped, tag = 'output window, operand 0, single buffered']
    #allocation3 [shape = 's32[1]{0}', space=sflag, size = 0x4, scoped, tag = 'scoped memory for tpu_custom_call.1']
    #allocation4 [shape = 's32[1]{0}', space=sflag, size = 0x4, scoped, tag = 'scoped memory for tpu_custom_call.1']
    #allocation5 [shape = 'u8[512]{0}', space=smem, size = 0x200, scoped, tag = 'output window, operand 1, single buffered']
    %16 = vsyncpa [#allocation3], 0
    %17 = vsyncpa [#allocation4], 0
    // Predicated region
    $region2: #{tpu_custom_call.1} parent=1 // pred_check
      _
    $region3: #{tpu_custom_call.1} parent=1 // pred_check_branch
      %19 = sbr.rel (0) target = $region5
    $region4: #{tpu_custom_call.1} parent=1 // pred_region
      _
    $region5: #{tpu_custom_call.1} parent=1 // pred_fallthru
      _
    // Predicated region
    $region6: #{tpu_custom_call.1} parent=1 // pred_check
      _
    $region7: #{tpu_custom_call.1} parent=1 // pred_check_branch
      %21 = sbr.rel (0) target = $region9
    $region8: #{tpu_custom_call.1} parent=1 // pred_region
      _
    $region9: #{tpu_custom_call.1} parent=1 // pred_fallthru
      _
    // Predicated region
    $region10: #{tpu_custom_call.1} parent=1 // pred_check
      _
    $region11: #{tpu_custom_call.1} parent=1 // pred_check_branch
      %23 = sbr.rel (0) target = $region13
    $region12: #{tpu_custom_call.1} parent=1 // pred_region
      _
    $region13: #{tpu_custom_call.1} parent=1 // pred_fallthru
      _
    // Predicated region
    $region14: #{tpu_custom_call.1} parent=1 // pred_check
      _
    $region15: #{tpu_custom_call.1} parent=1 // pred_check_branch
      %25 = sbr.rel (0) target = $region17
    $region16: #{tpu_custom_call.1} parent=1 // pred_region
      _
    $region17: #{tpu_custom_call.1} parent=1 // pred_fallthru
      _
    // Predicated region
    $region18: #{tpu_custom_call.1} parent=1 // pred_check
      _
    $region19: #{tpu_custom_call.1} parent=1 // pred_check_branch
      %27 = sbr.rel (0) target = $region21
    $region20: #{tpu_custom_call.1} parent=1 // pred_region
      _
    $region21: #{tpu_custom_call.1} parent=1 // pred_fallthru
      _
    // Predicated region
    $region22: #{tpu_custom_call.1} parent=1 // pred_check
      _
    $region23: #{tpu_custom_call.1} parent=1 // pred_check_branch
      %29 = sbr.rel (0) target = $region25
    $region24: #{tpu_custom_call.1} parent=1 // pred_region
      _
    $region25: #{tpu_custom_call.1} parent=1 // pred_fallthru
      _
    // Predicated region
    $region26: #{tpu_custom_call.1} parent=1 // pred_check
      _
    $region27: #{tpu_custom_call.1} parent=1 // pred_check_branch
      %31 = sbr.rel (0) target = $region29
    $region28: #{tpu_custom_call.1} parent=1 // pred_region
      _
    $region29: #{tpu_custom_call.1} parent=1 // pred_fallthru
      _
    // Predicated region
    $region30: #{tpu_custom_call.1} parent=1 // pred_check
      _
    $region31: #{tpu_custom_call.1} parent=1 // pred_check_branch
      %33 = sbr.rel (0) target = $region33
    $region32: #{tpu_custom_call.1} parent=1 // pred_region
      _
    $region33: #{tpu_custom_call.1} parent=1 // pred_fallthru
      _
    // Predicated region
    $region34: #{tpu_custom_call.1} parent=1 // pred_check
      _
    $region35: #{tpu_custom_call.1} parent=1 // pred_check_branch
      %35 = sbr.rel (0) target = $region37
    $region36: #{tpu_custom_call.1} parent=1 // pred_region
      _
    $region37: #{tpu_custom_call.1} parent=1 // pred_fallthru
      _
    %v37 = vld [vmem:[%s0] sm:$0x3]
    %v38 = vld [vmem:[%s8] sm:$0x1]
    %v39 = vpack.c.bf16 %v37, %v37
    %v40 = vld [vmem:[%s4] sm:$0xf]
    %v41 = vld [vmem:[%s4 + $0x4] sm:$0xf]
    %v42 = vld [vmem:[%s4 + $0x8] sm:$0xf]
    %v43 = vld [vmem:[%s4 + $0xc] sm:$0xf]
    %v44 = vld [vmem:[%s4 + $0x10] sm:$0xf]
    %v45 = vld [vmem:[%s4 + $0x14] sm:$0xf]
    %v46 = vld [vmem:[%s4 + $0x18] sm:$0xf]
    %v48 = vperm.slane %v38, 0
    %v57 = vunpack.c.l.b16 %v40
    %v58 = vunpack.c.l.b16 %v41
    %v59 = vunpack.c.l.b16 %v42
    %v60 = vunpack.c.l.b16 %v43
    %v61 = vunpack.c.l.b16 %v44
    %v62 = vunpack.c.l.b16 %v45
    %v63 = vunpack.c.l.b16 %v46
    %v64 = vpack.c.b16 %v58, %v57
    %v65 = vpack.c.b16 %v60, %v59
    %v66 = vpack.c.b16 %v62, %v61
    %v67 = vpack.c.b16 %v63, %v63
    %vm71 = vcmask 457728
    %v73 = vsel %vm71, %v39, 0
    %vm75 = vcmask 1043456
    %v77 = vsel %vm75, %v67, 0
    %79 = vmatpush.bf16.msra.mxu0 0
    %80 = vmatpush.bf16.msra.mxu0 0
    %81 = vmatpush.bf16.msra.mxu0 0
    %82 = vmatpush.bf16.msra.mxu0 0
    %83 = vmatpush.bf16.msra.mxu0 %v77
    %84 = vmatpush.bf16.msra.mxu0 %v66
    %85 = vmatpush.bf16.msra.mxu0 %v65
    %86 = vmatpush.bf16.msra.mxu0 %v64
    %87 = vmatmul.bf16.gmra.mxu0 %v73
    %v88 = vpop.f32.mrf.mxu0
    %v89 = vadd.f32 %v48, %v88
    %v90 = vpop.f32.mrf.mxu0
    %91 = vdwg.mxu0
    %v92 = vmax.f32 %v89, 0.0
    %v93 = vpack.c.bf16 %v92, %v92
    %v94 = vld [vmem:[%s5] sm:$0xf]
    %v95 = vld [vmem:[%s5 + $0x4] sm:$0xf]
    %v96 = vld [vmem:[%s5 + $0x8] sm:$0xf]
    %v97 = vld [vmem:[%s5 + $0xc] sm:$0xf]
    %v102 = vunpack.c.l.b16 %v94
    %v103 = vunpack.c.l.b16 %v95
    %v104 = vunpack.c.l.b16 %v96
    %v105 = vunpack.c.l.b16 %v97
    %v106 = vpack.c.b16 %v103, %v102
    %v107 = vpack.c.b16 %v105, %v104
    %110 = vrot.lane.b32.xlu0 %v48, 96
    %v111 = vpop.permute.xlu0 %110
    %vm113 = vcmask 261120
    %v115 = vsel %vm113, %v93, 0
    %117 = vmatpush.bf16.msra.mxu0 0
    %118 = vmatpush.bf16.msra.mxu0 0
    %119 = vmatpush.bf16.msra.mxu0 0
    %120 = vmatpush.bf16.msra.mxu0 0
    %121 = vmatpush.bf16.msra.mxu0 0
    %122 = vmatpush.bf16.msra.mxu0 0
    %123 = vmatpush.bf16.msra.mxu0 %v107
    %124 = vmatpush.bf16.msra.mxu0 %v106
    %125 = vmatmul.bf16.gmra.mxu0 %v115
    %v126 = vpop.f32.mrf.mxu0
    %v127 = vadd.f32 %v111, %v126
    %v128 = vpop.f32.mrf.mxu0
    %129 = vdwg.mxu0
    %v130 = vmax.f32 %v127, 0.0
    %v131 = vpack.c.bf16 %v130, %v130
    %s132 = scalar_lea.vmem %s5, 16
    %v133 = vld [vmem:[%s132] sm:$0xf]
    %v134 = vld [vmem:[%s132 + $0x4] sm:$0xf]
    %v135 = vld [vmem:[%s132 + $0x8] sm:$0xf]
    %v136 = vld [vmem:[%s132 + $0xc] sm:$0xf]
    %v141 = vunpack.c.l.b16 %v133
    %v142 = vunpack.c.l.b16 %v134
    %v143 = vunpack.c.l.b16 %v135
    %v144 = vunpack.c.l.b16 %v136
    %v145 = vpack.c.b16 %v142, %v141
    %v146 = vpack.c.b16 %v144, %v143
    %149 = vrot.lane.b32.xlu0 %v48, 64
    %v150 = vpop.permute.xlu0 %149
    %v153 = vsel %vm113, %v131, 0
    %155 = vmatpush.bf16.msra.mxu0 0
    %156 = vmatpush.bf16.msra.mxu0 0
    %157 = vmatpush.bf16.msra.mxu0 0
    %158 = vmatpush.bf16.msra.mxu0 0
    %159 = vmatpush.bf16.msra.mxu0 0
    %160 = vmatpush.bf16.msra.mxu0 0
    %161 = vmatpush.bf16.msra.mxu0 %v146
    %162 = vmatpush.bf16.msra.mxu0 %v145
    %163 = vmatmul.bf16.gmra.mxu0 %v153
    %v164 = vpop.f32.mrf.mxu0
    %v165 = vadd.f32 %v150, %v164
    %v166 = vpop.f32.mrf.mxu0
    %167 = vdwg.mxu0
    %v168 = vmax.f32 %v165, 0.0
    %v169 = vpack.c.bf16 %v168, %v168
    %v170 = vld [vmem:[%s6] sm:$0xf]
    %v171 = vld [vmem:[%s6 + $0x4] sm:$0xf]
    %v172 = vld [vmem:[%s6 + $0x8] sm:$0xf]
    %v173 = vld [vmem:[%s6 + $0xc] sm:$0xf]
    %v178 = vunpack.c.l.b16 %v170
    %v179 = vunpack.c.l.b16 %v171
    %v180 = vunpack.c.l.b16 %v172
    %v181 = vunpack.c.l.b16 %v173
    %v182 = vpack.c.b16 %v179, %v178
    %v183 = vpack.c.b16 %v181, %v180
    %186 = vrot.lane.b32.xlu0 %v48, 32
    %v187 = vpop.permute.xlu0 %186
    %v190 = vsel %vm113, %v169, 0
    %192 = vmatpush.bf16.msra.mxu0 0
    %193 = vmatpush.bf16.msra.mxu0 0
    %194 = vmatpush.bf16.msra.mxu0 0
    %195 = vmatpush.bf16.msra.mxu0 0
    %196 = vmatpush.bf16.msra.mxu0 0
    %197 = vmatpush.bf16.msra.mxu0 0
    %198 = vmatpush.bf16.msra.mxu0 %v183
    %199 = vmatpush.bf16.msra.mxu0 %v182
    %200 = vmatmul.bf16.gmra.mxu0 %v190
    %v201 = vpop.f32.mrf.mxu0
    %v202 = vadd.f32 %v187, %v201
    %v203 = vpop.f32.mrf.mxu0
    %204 = vdwg.mxu0
    %v205 = vpack.c.bf16 %v202, %v202
    %v206 = vld [vmem:[%s7] sm:$0xf]
    %v207 = vld [vmem:[%s7 + $0x4] sm:$0xf]
    %v210 = vunpack.c.l.b16 %v206
    %v211 = vunpack.c.l.b16 %v207
    %v212 = vpack.c.b16 %v211, %v210
    %vm214 = vcmask 130048
    %v216 = vsel %vm214, %v205, 0
    %218 = vmatpush.bf16.msra.mxu0 0
    %219 = vmatpush.bf16.msra.mxu0 0
    %220 = vmatpush.bf16.msra.mxu0 0
    %221 = vmatpush.bf16.msra.mxu0 0
    %222 = vmatpush.bf16.msra.mxu0 0
    %223 = vmatpush.bf16.msra.mxu0 0
    %224 = vmatpush.bf16.msra.mxu0 0
    %225 = vmatpush.bf16.msra.mxu0 %v212
    %226 = vmatmul.bf16.gmra.mxu0 %v216
    %v227 = vpop.f32.mrf.mxu0
    %v228 = vadd.f32 0.0, %v227
    %v229 = vpop.f32.mrf.mxu0
    %230 = vdwg.mxu0
    %v231 = vsub.f32 %v37, %v228
    %v232 = vadd.f32 %v228, 0.0
    %s233 = scalar_lea.vmem %s8, 1
    %v234 = vld [vmem:[%s233] sm:$0x1]
    %v235 = vpack.c.bf16 %v231, %v231
    %s236 = scalar_lea.vmem %s4, 28
    %v237 = vld [vmem:[%s236] sm:$0xf]
    %v238 = vld [vmem:[%s236 + $0x4] sm:$0xf]
    %v239 = vld [vmem:[%s236 + $0x8] sm:$0xf]
    %v240 = vld [vmem:[%s236 + $0xc] sm:$0xf]
    %v241 = vld [vmem:[%s236 + $0x10] sm:$0xf]
    %v242 = vld [vmem:[%s236 + $0x14] sm:$0xf]
    %v243 = vld [vmem:[%s236 + $0x18] sm:$0xf]
    %v245 = vperm.slane %v234, 0
    %v254 = vunpack.c.l.b16 %v237
    %v255 = vunpack.c.l.b16 %v238
    %v256 = vunpack.c.l.b16 %v239
    %v257 = vunpack.c.l.b16 %v240
    %v258 = vunpack.c.l.b16 %v241
    %v259 = vunpack.c.l.b16 %v242
    %v260 = vunpack.c.l.b16 %v243
    %v261 = vpack.c.b16 %v255, %v254
    %v262 = vpack.c.b16 %v257, %v256
    %v263 = vpack.c.b16 %v259, %v258
    %v264 = vpack.c.b16 %v260, %v260
    %v269 = vsel %vm71, %v235, 0
    %v272 = vsel %vm75, %v264, 0
    %274 = vmatpush.bf16.msra.mxu0 0
    %275 = vmatpush.bf16.msra.mxu0 0
    %276 = vmatpush.bf16.msra.mxu0 0
    %277 = vmatpush.bf16.msra.mxu0 0
    %278 = vmatpush.bf16.msra.mxu0 %v272
    %279 = vmatpush.bf16.msra.mxu0 %v263
    %280 = vmatpush.bf16.msra.mxu0 %v262
    %281 = vmatpush.bf16.msra.mxu0 %v261
    %282 = vmatmul.bf16.gmra.mxu0 %v269
    %v283 = vpop.f32.mrf.mxu0
    %v284 = vadd.f32 %v245, %v283
    %v285 = vpop.f32.mrf.mxu0
    %286 = vdwg.mxu0
    %v287 = vmax.f32 %v284, 0.0
    %v288 = vpack.c.bf16 %v287, %v287
    %s289 = scalar_lea.vmem %s5, 32
    %v290 = vld [vmem:[%s289] sm:$0xf]
    %v291 = vld [vmem:[%s289 + $0x4] sm:$0xf]
    %v292 = vld [vmem:[%s289 + $0x8] sm:$0xf]
    %v293 = vld [vmem:[%s289 + $0xc] sm:$0xf]
    %v298 = vunpack.c.l.b16 %v290
    %v299 = vunpack.c.l.b16 %v291
    %v300 = vunpack.c.l.b16 %v292
    %v301 = vunpack.c.l.b16 %v293
    %v302 = vpack.c.b16 %v299, %v298
    %v303 = vpack.c.b16 %v301, %v300
    %306 = vrot.lane.b32.xlu0 %v245, 96
    %v307 = vpop.permute.xlu0 %306
    %v310 = vsel %vm113, %v288, 0
    %312 = vmatpush.bf16.msra.mxu0 0
    %313 = vmatpush.bf16.msra.mxu0 0
    %314 = vmatpush.bf16.msra.mxu0 0
    %315 = vmatpush.bf16.msra.mxu0 0
    %316 = vmatpush.bf16.msra.mxu0 0
    %317 = vmatpush.bf16.msra.mxu0 0
    %318 = vmatpush.bf16.msra.mxu0 %v303
    %319 = vmatpush.bf16.msra.mxu0 %v302
    %320 = vmatmul.bf16.gmra.mxu0 %v310
    %v321 = vpop.f32.mrf.mxu0
    %v322 = vadd.f32 %v307, %v321
    %v323 = vpop.f32.mrf.mxu0
    %324 = vdwg.mxu0
    %v325 = vmax.f32 %v322, 0.0
    %v326 = vpack.c.bf16 %v325, %v325
    %s327 = scalar_lea.vmem %s5, 48
    %v328 = vld [vmem:[%s327] sm:$0xf]
    %v329 = vld [vmem:[%s327 + $0x4] sm:$0xf]
    %v330 = vld [vmem:[%s327 + $0x8] sm:$0xf]
    %v331 = vld [vmem:[%s327 + $0xc] sm:$0xf]
    %v336 = vunpack.c.l.b16 %v328
    %v337 = vunpack.c.l.b16 %v329
    %v338 = vunpack.c.l.b16 %v330
    %v339 = vunpack.c.l.b16 %v331
    %v340 = vpack.c.b16 %v337, %v336
    %v341 = vpack.c.b16 %v339, %v338
    %344 = vrot.lane.b32.xlu0 %v245, 64
    %v345 = vpop.permute.xlu0 %344
    %v348 = vsel %vm113, %v326, 0
    %350 = vmatpush.bf16.msra.mxu0 0
    %351 = vmatpush.bf16.msra.mxu0 0
    %352 = vmatpush.bf16.msra.mxu0 0
    %353 = vmatpush.bf16.msra.mxu0 0
    %354 = vmatpush.bf16.msra.mxu0 0
    %355 = vmatpush.bf16.msra.mxu0 0
    %356 = vmatpush.bf16.msra.mxu0 %v341
    %357 = vmatpush.bf16.msra.mxu0 %v340
    %358 = vmatmul.bf16.gmra.mxu0 %v348
    %v359 = vpop.f32.mrf.mxu0
    %v360 = vadd.f32 %v345, %v359
    %v361 = vpop.f32.mrf.mxu0
    %362 = vdwg.mxu0
    %v363 = vmax.f32 %v360, 0.0
    %v364 = vpack.c.bf16 %v363, %v363
    %s365 = scalar_lea.vmem %s6, 16
    %v366 = vld [vmem:[%s365] sm:$0xf]
    %v367 = vld [vmem:[%s365 + $0x4] sm:$0xf]
    %v368 = vld [vmem:[%s365 + $0x8] sm:$0xf]
    %v369 = vld [vmem:[%s365 + $0xc] sm:$0xf]
    %v374 = vunpack.c.l.b16 %v366
    %v375 = vunpack.c.l.b16 %v367
    %v376 = vunpack.c.l.b16 %v368
    %v377 = vunpack.c.l.b16 %v369
    %v378 = vpack.c.b16 %v375, %v374
    %v379 = vpack.c.b16 %v377, %v376
    %382 = vrot.lane.b32.xlu0 %v245, 32
    %v383 = vpop.permute.xlu0 %382
    %v386 = vsel %vm113, %v364, 0
    %388 = vmatpush.bf16.msra.mxu0 0
    %389 = vmatpush.bf16.msra.mxu0 0
    %390 = vmatpush.bf16.msra.mxu0 0
    %391 = vmatpush.bf16.msra.mxu0 0
    %392 = vmatpush.bf16.msra.mxu0 0
    %393 = vmatpush.bf16.msra.mxu0 0
    %394 = vmatpush.bf16.msra.mxu0 %v379
    %395 = vmatpush.bf16.msra.mxu0 %v378
    %396 = vmatmul.bf16.gmra.mxu0 %v386
    %v397 = vpop.f32.mrf.mxu0
    %v398 = vadd.f32 %v383, %v397
    %v399 = vpop.f32.mrf.mxu0
    %400 = vdwg.mxu0
    %v401 = vpack.c.bf16 %v398, %v398
    %s402 = scalar_lea.vmem %s7, 8
    %v403 = vld [vmem:[%s402] sm:$0xf]
    %v404 = vld [vmem:[%s402 + $0x4] sm:$0xf]
    %v407 = vunpack.c.l.b16 %v403
    %v408 = vunpack.c.l.b16 %v404
    %v409 = vpack.c.b16 %v408, %v407
    %v412 = vsel %vm214, %v401, 0
    %414 = vmatpush.bf16.msra.mxu0 0
    %415 = vmatpush.bf16.msra.mxu0 0
    %416 = vmatpush.bf16.msra.mxu0 0
    %417 = vmatpush.bf16.msra.mxu0 0
    %418 = vmatpush.bf16.msra.mxu0 0
    %419 = vmatpush.bf16.msra.mxu0 0
    %420 = vmatpush.bf16.msra.mxu0 0
    %421 = vmatpush.bf16.msra.mxu0 %v409
    %422 = vmatmul.bf16.gmra.mxu0 %v412
    %v423 = vpop.f32.mrf.mxu0
    %v424 = vadd.f32 0.0, %v423
    %v425 = vpop.f32.mrf.mxu0
    %426 = vdwg.mxu0
    %v427 = vsub.f32 %v231, %v424
    %v428 = vadd.f32 %v232, %v424
    %s429 = scalar_lea.vmem %s8, 2
    %v430 = vld [vmem:[%s429] sm:$0x1]
    %v431 = vpack.c.bf16 %v427, %v427
    %s432 = scalar_lea.vmem %s4, 56
    %v433 = vld [vmem:[%s432] sm:$0xf]
    %v434 = vld [vmem:[%s432 + $0x4] sm:$0xf]
    %v435 = vld [vmem:[%s432 + $0x8] sm:$0xf]
    %v436 = vld [vmem:[%s432 + $0xc] sm:$0xf]
    %v437 = vld [vmem:[%s432 + $0x10] sm:$0xf]
    %v438 = vld [vmem:[%s432 + $0x14] sm:$0xf]
    %v439 = vld [vmem:[%s432 + $0x18] sm:$0xf]
    %v441 = vperm.slane %v430, 0
    %v450 = vunpack.c.l.b16 %v433
    %v451 = vunpack.c.l.b16 %v434
    %v452 = vunpack.c.l.b16 %v435
    %v453 = vunpack.c.l.b16 %v436
    %v454 = vunpack.c.l.b16 %v437
    %v455 = vunpack.c.l.b16 %v438
    %v456 = vunpack.c.l.b16 %v439
    %v457 = vpack.c.b16 %v451, %v450
    %v458 = vpack.c.b16 %v453, %v452
    %v459 = vpack.c.b16 %v455, %v454
    %v460 = vpack.c.b16 %v456, %v456
    %v465 = vsel %vm71, %v431, 0
    %v468 = vsel %vm75, %v460, 0
    %470 = vmatpush.bf16.msra.mxu0 0
    %471 = vmatpush.bf16.msra.mxu0 0
    %472 = vmatpush.bf16.msra.mxu0 0
    %473 = vmatpush.bf16.msra.mxu0 0
    %474 = vmatpush.bf16.msra.mxu0 %v468
    %475 = vmatpush.bf16.msra.mxu0 %v459
    %476 = vmatpush.bf16.msra.mxu0 %v458
    %477 = vmatpush.bf16.msra.mxu0 %v457
    %478 = vmatmul.bf16.gmra.mxu0 %v465
    %v479 = vpop.f32.mrf.mxu0
    %v480 = vadd.f32 %v441, %v479
    %v481 = vpop.f32.mrf.mxu0
    %482 = vdwg.mxu0
    %v483 = vmax.f32 %v480, 0.0
    %v484 = vpack.c.bf16 %v483, %v483
    %s485 = scalar_lea.vmem %s5, 64
    %v486 = vld [vmem:[%s485] sm:$0xf]
    %v487 = vld [vmem:[%s485 + $0x4] sm:$0xf]
    %v488 = vld [vmem:[%s485 + $0x8] sm:$0xf]
    %v489 = vld [vmem:[%s485 + $0xc] sm:$0xf]
    %v494 = vunpack.c.l.b16 %v486
    %v495 = vunpack.c.l.b16 %v487
    %v496 = vunpack.c.l.b16 %v488
    %v497 = vunpack.c.l.b16 %v489
    %v498 = vpack.c.b16 %v495, %v494
    %v499 = vpack.c.b16 %v497, %v496
    %502 = vrot.lane.b32.xlu0 %v441, 96
    %v503 = vpop.permute.xlu0 %502
    %v506 = vsel %vm113, %v484, 0
    %508 = vmatpush.bf16.msra.mxu0 0
    %509 = vmatpush.bf16.msra.mxu0 0
    %510 = vmatpush.bf16.msra.mxu0 0
    %511 = vmatpush.bf16.msra.mxu0 0
    %512 = vmatpush.bf16.msra.mxu0 0
    %513 = vmatpush.bf16.msra.mxu0 0
    %514 = vmatpush.bf16.msra.mxu0 %v499
    %515 = vmatpush.bf16.msra.mxu0 %v498
    %516 = vmatmul.bf16.gmra.mxu0 %v506
    %v517 = vpop.f32.mrf.mxu0
    %v518 = vadd.f32 %v503, %v517
    %v519 = vpop.f32.mrf.mxu0
    %520 = vdwg.mxu0
    %v521 = vmax.f32 %v518, 0.0
    %v522 = vpack.c.bf16 %v521, %v521
    %s523 = scalar_lea.vmem %s5, 80
    %v524 = vld [vmem:[%s523] sm:$0xf]
    %v525 = vld [vmem:[%s523 + $0x4] sm:$0xf]
    %v526 = vld [vmem:[%s523 + $0x8] sm:$0xf]
    %v527 = vld [vmem:[%s523 + $0xc] sm:$0xf]
    %v532 = vunpack.c.l.b16 %v524
    %v533 = vunpack.c.l.b16 %v525
    %v534 = vunpack.c.l.b16 %v526
    %v535 = vunpack.c.l.b16 %v527
    %v536 = vpack.c.b16 %v533, %v532
    %v537 = vpack.c.b16 %v535, %v534
    %540 = vrot.lane.b32.xlu0 %v441, 64
    %v541 = vpop.permute.xlu0 %540
    %v544 = vsel %vm113, %v522, 0
    %546 = vmatpush.bf16.msra.mxu0 0
    %547 = vmatpush.bf16.msra.mxu0 0
    %548 = vmatpush.bf16.msra.mxu0 0
    %549 = vmatpush.bf16.msra.mxu0 0
    %550 = vmatpush.bf16.msra.mxu0 0
    %551 = vmatpush.bf16.msra.mxu0 0
    %552 = vmatpush.bf16.msra.mxu0 %v537
    %553 = vmatpush.bf16.msra.mxu0 %v536
    %554 = vmatmul.bf16.gmra.mxu0 %v544
    %v555 = vpop.f32.mrf.mxu0
    %v556 = vadd.f32 %v541, %v555
    %v557 = vpop.f32.mrf.mxu0
    %558 = vdwg.mxu0
    %v559 = vmax.f32 %v556, 0.0
    %v560 = vpack.c.bf16 %v559, %v559
    %s561 = scalar_lea.vmem %s6, 32
    %v562 = vld [vmem:[%s561] sm:$0xf]
    %v563 = vld [vmem:[%s561 + $0x4] sm:$0xf]
    %v564 = vld [vmem:[%s561 + $0x8] sm:$0xf]
    %v565 = vld [vmem:[%s561 + $0xc] sm:$0xf]
    %v570 = vunpack.c.l.b16 %v562
    %v571 = vunpack.c.l.b16 %v563
    %v572 = vunpack.c.l.b16 %v564
    %v573 = vunpack.c.l.b16 %v565
    %v574 = vpack.c.b16 %v571, %v570
    %v575 = vpack.c.b16 %v573, %v572
    %578 = vrot.lane.b32.xlu0 %v441, 32
    %v579 = vpop.permute.xlu0 %578
    %v582 = vsel %vm113, %v560, 0
    %584 = vmatpush.bf16.msra.mxu0 0
    %585 = vmatpush.bf16.msra.mxu0 0
    %586 = vmatpush.bf16.msra.mxu0 0
    %587 = vmatpush.bf16.msra.mxu0 0
    %588 = vmatpush.bf16.msra.mxu0 0
    %589 = vmatpush.bf16.msra.mxu0 0
    %590 = vmatpush.bf16.msra.mxu0 %v575
    %591 = vmatpush.bf16.msra.mxu0 %v574
    %592 = vmatmul.bf16.gmra.mxu0 %v582
    %v593 = vpop.f32.mrf.mxu0
    %v594 = vadd.f32 %v579, %v593
    %v595 = vpop.f32.mrf.mxu0
    %596 = vdwg.mxu0
    %v597 = vpack.c.bf16 %v594, %v594
    %s598 = scalar_lea.vmem %s7, 16
    %v599 = vld [vmem:[%s598] sm:$0xf]
    %v600 = vld [vmem:[%s598 + $0x4] sm:$0xf]
    %v603 = vunpack.c.l.b16 %v599
    %v604 = vunpack.c.l.b16 %v600
    %v605 = vpack.c.b16 %v604, %v603
    %v608 = vsel %vm214, %v597, 0
    %610 = vmatpush.bf16.msra.mxu0 0
    %611 = vmatpush.bf16.msra.mxu0 0
    %612 = vmatpush.bf16.msra.mxu0 0
    %613 = vmatpush.bf16.msra.mxu0 0
    %614 = vmatpush.bf16.msra.mxu0 0
    %615 = vmatpush.bf16.msra.mxu0 0
    %616 = vmatpush.bf16.msra.mxu0 0
    %617 = vmatpush.bf16.msra.mxu0 %v605
    %618 = vmatmul.bf16.gmra.mxu0 %v608
    %v619 = vpop.f32.mrf.mxu0
    %v620 = vadd.f32 0.0, %v619
    %v621 = vpop.f32.mrf.mxu0
    %622 = vdwg.mxu0
    %v623 = vsub.f32 %v427, %v620
    %v624 = vadd.f32 %v428, %v620
    %s625 = scalar_lea.vmem %s8, 3
    %v626 = vld [vmem:[%s625] sm:$0x1]
    %v627 = vpack.c.bf16 %v623, %v623
    %s628 = scalar_lea.vmem %s4, 84
    %v629 = vld [vmem:[%s628] sm:$0xf]
    %v630 = vld [vmem:[%s628 + $0x4] sm:$0xf]
    %v631 = vld [vmem:[%s628 + $0x8] sm:$0xf]
    %v632 = vld [vmem:[%s628 + $0xc] sm:$0xf]
    %v633 = vld [vmem:[%s628 + $0x10] sm:$0xf]
    %v634 = vld [vmem:[%s628 + $0x14] sm:$0xf]
    %v635 = vld [vmem:[%s628 + $0x18] sm:$0xf]
    %v637 = vperm.slane %v626, 0
    %v646 = vunpack.c.l.b16 %v629
    %v647 = vunpack.c.l.b16 %v630
    %v648 = vunpack.c.l.b16 %v631
    %v649 = vunpack.c.l.b16 %v632
    %v650 = vunpack.c.l.b16 %v633
    %v651 = vunpack.c.l.b16 %v634
    %v652 = vunpack.c.l.b16 %v635
    %v653 = vpack.c.b16 %v647, %v646
    %v654 = vpack.c.b16 %v649, %v648
    %v655 = vpack.c.b16 %v651, %v650
    %v656 = vpack.c.b16 %v652, %v652
    %v661 = vsel %vm71, %v627, 0
    %v664 = vsel %vm75, %v656, 0
    %666 = vmatpush.bf16.msra.mxu0 0
    %667 = vmatpush.bf16.msra.mxu0 0
    %668 = vmatpush.bf16.msra.mxu0 0
    %669 = vmatpush.bf16.msra.mxu0 0
    %670 = vmatpush.bf16.msra.mxu0 %v664
    %671 = vmatpush.bf16.msra.mxu0 %v655
    %672 = vmatpush.bf16.msra.mxu0 %v654
    %673 = vmatpush.bf16.msra.mxu0 %v653
    %674 = vmatmul.bf16.gmra.mxu0 %v661
    %v675 = vpop.f32.mrf.mxu0
    %v676 = vadd.f32 %v637, %v675
    %v677 = vpop.f32.mrf.mxu0
    %678 = vdwg.mxu0
    %v679 = vmax.f32 %v676, 0.0
    %v680 = vpack.c.bf16 %v679, %v679
    %s681 = scalar_lea.vmem %s5, 96
    %v682 = vld [vmem:[%s681] sm:$0xf]
    %v683 = vld [vmem:[%s681 + $0x4] sm:$0xf]
    %v684 = vld [vmem:[%s681 + $0x8] sm:$0xf]
    %v685 = vld [vmem:[%s681 + $0xc] sm:$0xf]
    %v690 = vunpack.c.l.b16 %v682
    %v691 = vunpack.c.l.b16 %v683
    %v692 = vunpack.c.l.b16 %v684
    %v693 = vunpack.c.l.b16 %v685
    %v694 = vpack.c.b16 %v691, %v690
    %v695 = vpack.c.b16 %v693, %v692
    %698 = vrot.lane.b32.xlu0 %v637, 96
    %v699 = vpop.permute.xlu0 %698
    %v702 = vsel %vm113, %v680, 0
    %704 = vmatpush.bf16.msra.mxu0 0
    %705 = vmatpush.bf16.msra.mxu0 0
    %706 = vmatpush.bf16.msra.mxu0 0
    %707 = vmatpush.bf16.msra.mxu0 0
    %708 = vmatpush.bf16.msra.mxu0 0
    %709 = vmatpush.bf16.msra.mxu0 0
    %710 = vmatpush.bf16.msra.mxu0 %v695
    %711 = vmatpush.bf16.msra.mxu0 %v694
    %712 = vmatmul.bf16.gmra.mxu0 %v702
    %v713 = vpop.f32.mrf.mxu0
    %v714 = vadd.f32 %v699, %v713
    %v715 = vpop.f32.mrf.mxu0
    %716 = vdwg.mxu0
    %v717 = vmax.f32 %v714, 0.0
    %v718 = vpack.c.bf16 %v717, %v717
    %s719 = scalar_lea.vmem %s5, 112
    %v720 = vld [vmem:[%s719] sm:$0xf]
    %v721 = vld [vmem:[%s719 + $0x4] sm:$0xf]
    %v722 = vld [vmem:[%s719 + $0x8] sm:$0xf]
    %v723 = vld [vmem:[%s719 + $0xc] sm:$0xf]
    %v728 = vunpack.c.l.b16 %v720
    %v729 = vunpack.c.l.b16 %v721
    %v730 = vunpack.c.l.b16 %v722
    %v731 = vunpack.c.l.b16 %v723
    %v732 = vpack.c.b16 %v729, %v728
    %v733 = vpack.c.b16 %v731, %v730
    %736 = vrot.lane.b32.xlu0 %v637, 64
    %v737 = vpop.permute.xlu0 %736
    %v740 = vsel %vm113, %v718, 0
    %742 = vmatpush.bf16.msra.mxu0 0
    %743 = vmatpush.bf16.msra.mxu0 0
    %744 = vmatpush.bf16.msra.mxu0 0
    %745 = vmatpush.bf16.msra.mxu0 0
    %746 = vmatpush.bf16.msra.mxu0 0
    %747 = vmatpush.bf16.msra.mxu0 0
    %748 = vmatpush.bf16.msra.mxu0 %v733
    %749 = vmatpush.bf16.msra.mxu0 %v732
    %750 = vmatmul.bf16.gmra.mxu0 %v740
    %v751 = vpop.f32.mrf.mxu0
    %v752 = vadd.f32 %v737, %v751
    %v753 = vpop.f32.mrf.mxu0
    %754 = vdwg.mxu0
    %v755 = vmax.f32 %v752, 0.0
    %v756 = vpack.c.bf16 %v755, %v755
    %s757 = scalar_lea.vmem %s6, 48
    %v758 = vld [vmem:[%s757] sm:$0xf]
    %v759 = vld [vmem:[%s757 + $0x4] sm:$0xf]
    %v760 = vld [vmem:[%s757 + $0x8] sm:$0xf]
    %v761 = vld [vmem:[%s757 + $0xc] sm:$0xf]
    %v766 = vunpack.c.l.b16 %v758
    %v767 = vunpack.c.l.b16 %v759
    %v768 = vunpack.c.l.b16 %v760
    %v769 = vunpack.c.l.b16 %v761
    %v770 = vpack.c.b16 %v767, %v766
    %v771 = vpack.c.b16 %v769, %v768
    %774 = vrot.lane.b32.xlu0 %v637, 32
    %v775 = vpop.permute.xlu0 %774
    %v778 = vsel %vm113, %v756, 0
    %780 = vmatpush.bf16.msra.mxu0 0
    %781 = vmatpush.bf16.msra.mxu0 0
    %782 = vmatpush.bf16.msra.mxu0 0
    %783 = vmatpush.bf16.msra.mxu0 0
    %784 = vmatpush.bf16.msra.mxu0 0
    %785 = vmatpush.bf16.msra.mxu0 0
    %786 = vmatpush.bf16.msra.mxu0 %v771
    %787 = vmatpush.bf16.msra.mxu0 %v770
    %788 = vmatmul.bf16.gmra.mxu0 %v778
    %v789 = vpop.f32.mrf.mxu0
    %v790 = vadd.f32 %v775, %v789
    %v791 = vpop.f32.mrf.mxu0
    %792 = vdwg.mxu0
    %v793 = vpack.c.bf16 %v790, %v790
    %s794 = scalar_lea.vmem %s7, 24
    %v795 = vld [vmem:[%s794] sm:$0xf]
    %v796 = vld [vmem:[%s794 + $0x4] sm:$0xf]
    %v799 = vunpack.c.l.b16 %v795
    %v800 = vunpack.c.l.b16 %v796
    %v801 = vpack.c.b16 %v800, %v799
    %v804 = vsel %vm214, %v793, 0
    %806 = vmatpush.bf16.msra.mxu0 0
    %807 = vmatpush.bf16.msra.mxu0 0
    %808 = vmatpush.bf16.msra.mxu0 0
    %809 = vmatpush.bf16.msra.mxu0 0
    %810 = vmatpush.bf16.msra.mxu0 0
    %811 = vmatpush.bf16.msra.mxu0 0
    %812 = vmatpush.bf16.msra.mxu0 0
    %813 = vmatpush.bf16.msra.mxu0 %v801
    %814 = vmatmul.bf16.gmra.mxu0 %v804
    %v815 = vpop.f32.mrf.mxu0
    %v816 = vadd.f32 0.0, %v815
    %v817 = vpop.f32.mrf.mxu0
    %818 = vdwg.mxu0
    %v819 = vadd.f32 %v624, %v816
    %821 = vrot.lane.b32.xlu0 %v819, 72
    %v822 = vpop.permute.xlu0 %821
    %vm824 = vcmask 222208
    %825 = vst.msk [vmem:[#allocation2] sm:$0x3] %vm824, %v822
    %v826 = vld [vmem:[%s1] sm:$0x3]
    %v827 = vld [vmem:[%s3] sm:$0x3]
    %v828 = vld [vmem:[%s2] sm:$0x3]
    %v829 = vrcp.pop %v828
    %831 = vrot.lane.b32.xlu0 %v826, 56
    %v832 = vpop.permute.xlu0 %831
    %v834 = vsub.f32 %v819, %v832
    %v835 = vand.u32 2147483647, %v834
    %837 = vset.pattern.permute.xlu0 0
    %838 = vperm.xlu0 %837, %v827
    %v839 = vpop.permute.xlu0 %838
    %v841 = vmul.f32 %v839, %v835
    %843 = vset.pattern.permute.xlu0 0
    %844 = vperm.xlu0 %843, %v829
    %v845 = vpop.permute.xlu0 %844
    %v847 = vmul.f32 %v841, %v845
    %848 = vrot.lane.b32.xlu0 %v826, 84
    %v849 = vpop.permute.xlu0 %848
    %v851 = vsub.f32 %v819, %v849
    %v852 = vand.u32 2147483647, %v851
    %v853 = vmul.f32 %v839, %v852
    %v854 = vmul.f32 %v853, %v845
    %856 = vrot.lane.b32.xlu0 %v847, 72
    %v857 = vpop.permute.xlu0 %856
    %v859 = vsel %vm824, %v857, 0.0
    %860 = vadd.xlane.f32.xlu0 %v859
    %v861 = vpop.xlane.xlu0 %860
    %v862 = vrot.slane %v861, 4
    %v863 = vadd.f32 %v861, %v862
    %v864 = vrot.slane %v863, 2
    %v865 = vadd.f32 %v863, %v864
    %v866 = vrot.slane %v865, 1
    %v867 = vadd.f32 %v865, %v866
    %s868 = vtos %v867
    %v869 = vrcp.pop 56.0
    %v870 = vmul.f32 56.0, %v869
    %v871 = vsub.f32 1.0, %v870
    %v872 = vmul.f32 %v869, %v871
    %v873 = vadd.f32 %v869, %v872
    %vm874 = vweird.f32 %v869
    %v875 = vsel %vm874, %v869, %v873
    %s876 = vtos %v875
    %s877 = smul.f32 %s868, %s876
    %879 = vrot.lane.b32.xlu0 %v854, 44
    %v880 = vpop.permute.xlu0 %879
    %vm882 = vcmask 107520
    %v883 = vsel %vm882, %v880, 0.0
    %884 = vadd.xlane.f32.xlu0 %v883
    %v885 = vpop.xlane.xlu0 %884
    %v886 = vrot.slane %v885, 4
    %v887 = vadd.f32 %v885, %v886
    %v888 = vrot.slane %v887, 2
    %v889 = vadd.f32 %v887, %v888
    %v890 = vrot.slane %v889, 1
    %v891 = vadd.f32 %v889, %v890
    %s892 = vtos %v891
    %v893 = vrcp.pop 28.0
    %v894 = vmul.f32 28.0, %v893
    %v895 = vsub.f32 1.0, %v894
    %v896 = vmul.f32 %v893, %v895
    %v897 = vadd.f32 %v893, %v896
    %vm898 = vweird.f32 %v893
    %v899 = vsel %vm898, %v893, %v897
    %s900 = vtos %v899
    %s901 = smul.f32 %s892, %s900
    %s902 = sadd.f32 %s877, %s901
    %s903 = smul.f32 %s902, 0.5
    %s904 = scalar_lea.smem [#allocation5], 0
    %905 = sst [smem:[%s904]] %s903
    // Predicated region
    $region38: #{tpu_custom_call.1} parent=1 // pred_check
      _
    $region39: #{tpu_custom_call.1} parent=1 // pred_check_branch
      %907 = sbr.rel (0) target = $region41
    $region40: #{tpu_custom_call.1} parent=1 // pred_region
      %909 = vsyncadd [#allocation3], 0
      %s911 = sshll.u32 [#allocation2], 4
      %s912 = int_to_ptr.vmem [resolvable:$true] %s911
      %s913 = sshll.u32 %s9, 4
      %s914 = int_to_ptr.hbm [resolvable:$true] %s913
      %916 = dma.vmem_to_hbm [thread:$0]  %s912, 32, %s914, [#allocation3]
    $region41: #{tpu_custom_call.1} parent=1 // pred_fallthru
      _
    // Predicated region
    $region42: #{tpu_custom_call.1} parent=1 // pred_check
      _
    $region43: #{tpu_custom_call.1} parent=1 // pred_check_branch
      %918 = sbr.rel (0) target = $region45
    $region44: #{tpu_custom_call.1} parent=1 // pred_region
      %920 = vsyncadd [#allocation4], 0
      %s922 = sshll.u32 %s10, 4
      %s923 = int_to_ptr.hbm [resolvable:$true] %s922
      %925 = dma.smem_to_hbm [#allocation5], 16, %s923, [#allocation4]
    $region45: #{tpu_custom_call.1} parent=1 // pred_fallthru
      _
    // Predicated region
    $region46: #{tpu_custom_call.1} parent=1 // pred_check
      _
    $region47: #{tpu_custom_call.1} parent=1 // pred_check_branch
      %927 = sbr.rel (0) target = $region49
    $region48: #{tpu_custom_call.1} parent=1 // pred_region
      %929 = dma.done [#allocation3], 32
    $region49: #{tpu_custom_call.1} parent=1 // pred_fallthru
      _
    // Predicated region
    $region50: #{tpu_custom_call.1} parent=1 // pred_check
      _
    $region51: #{tpu_custom_call.1} parent=1 // pred_check_branch
      %931 = sbr.rel (0) target = $region53
    $region52: #{tpu_custom_call.1} parent=1 // pred_region
      %933 = dma.done [#allocation4], 16
    $region53: #{tpu_custom_call.1} parent=1 // pred_fallthru
      _
    %934 = sfence
    %935 = vsyncpa [#allocation3], 1
    %936 = vsyncpa [#allocation4], 1

</llo_original>
